<compile_context>
chip_gen: v7x
topology: tpu7x:2x2x1
jax: 0.10.0
libtpu: 0.0.40
codegen_flags: <defaults>
</compile_context>

<pallas_src>
import math
from functools import partial

import numpy as np
import jax
import jax.numpy as jnp
from jax.experimental import pallas as pl
from jax.experimental.pallas import tpu as pltpu


NEG_INF = -1e30   # finite "minus infinity": avoids NaN on fully-masked rows


def _pick_tile(n, target):
    """Largest tile <= target that divides n and is a multiple of 8 (else n itself)."""
    if n <= target:
        return n
    t = (target // 8) * 8
    while t >= 8:
        if n % t == 0:
            return t
        t -= 8
    return n


# ----------------------------------------------------------------------------
# Kernel 1: per-head QKV projection + RoPE.   grid = (B, T//TS, n_head)
# ----------------------------------------------------------------------------
def _qkv_rope_kernel(x_ref, wq_ref, wk_ref, wv_ref, bq_ref, bk_ref, bv_ref,
                     cos_ref, sin_ref, rot_ref, q_ref, k_ref, v_ref):
    x = x_ref[0].astype(jnp.bfloat16)                                   # (TS, C)

    # bf16 MXU matmuls, f32 accumulation
    q = jnp.dot(x, wq_ref[0], preferred_element_type=jnp.float32) + bq_ref[0]
    k = jnp.dot(x, wk_ref[0], preferred_element_type=jnp.float32) + bk_ref[0]
    v = jnp.dot(x, wv_ref[0], preferred_element_type=jnp.float32) + bv_ref[0]

    cos = cos_ref[...]                                                  # (TS, hs) f32
    sin = sin_ref[...]
    rot = rot_ref[...]                                                  # (hs, hs) rotate-half matrix

    # rotate-half as a tiny matmul -> no half-width slices / concats / rolls
    q_rot = jnp.dot(q, rot, preferred_element_type=jnp.float32)
    k_rot = jnp.dot(k, rot, preferred_element_type=jnp.float32)

    q_ref[0, 0] = (q * cos + q_rot * sin).astype(q_ref.dtype)
    k_ref[0, 0] = (k * cos + k_rot * sin).astype(k_ref.dtype)
    v_ref[0, 0] = v.astype(v_ref.dtype)


# ----------------------------------------------------------------------------
# Kernel 2: causal flash attention + output projection.
#           grid = (B, T//TQ, n_head, T//TK)  (heads & kv tiles are reductions)
# ----------------------------------------------------------------------------
def _flash_proj_kernel(q_ref, k_ref, v_ref, wp_ref, bp_ref, o_ref,
                       m_sc, l_sc, acc_sc, y_sc, *, tq, tk):
    qi = pl.program_id(1)
    h = pl.program_id(2)
    kv = pl.program_id(3)
    n_h = pl.num_programs(2)
    n_kv = pl.num_programs(3)

    @pl.when((h == 0) & (kv == 0))
    def _():                               # fresh (batch, q-tile): zero the merged-head accumulator
        y_sc[...] = jnp.zeros_like(y_sc)

    @pl.when(kv == 0)
    def _():                               # fresh head: reset online-softmax state
        m_sc[...] = jnp.full_like(m_sc, NEG_INF)
        l_sc[...] = jnp.zeros_like(l_sc)
        acc_sc[...] = jnp.zeros_like(acc_sc)

    q_start = qi * tq
    kv_start = kv * tk

    @pl.when(kv_start <= q_start + tq - 1)  # skip KV tiles that are entirely in the causal future
    def _():
        q = q_ref[0, 0]                                                 # (tq, hs) bf16
        k = k_ref[0, 0]                                                 # (tk, hs) bf16
        # contract last dims directly (no k.T relayout); scale is pre-folded into q weights
        s = jax.lax.dot_general(q, k, dimension_numbers=(((1,), (1,)), ((), ())),
                                preferred_element_type=jnp.float32)     # (tq, tk)

        # causal mask generated in-kernel (finite bias instead of -inf)
        row = q_start + jax.lax.broadcasted_iota(jnp.int32, (tq, tk), 0)
        col = kv_start + jax.lax.broadcasted_iota(jnp.int32, (tq, tk), 1)
        s = jnp.where(row >= col, s, NEG_INF)

        m_prev = m_sc[...]
        m_new = jnp.maximum(m_prev, jnp.max(s, axis=-1, keepdims=True))
        alpha = jnp.exp(m_prev - m_new)
        p = jnp.exp(s - m_new)
        l_sc[...] = alpha * l_sc[...] + jnp.sum(p, axis=-1, keepdims=True)
        acc_sc[...] = alpha * acc_sc[...] + jnp.dot(
            p.astype(jnp.bfloat16), v_ref[0, 0], preferred_element_type=jnp.float32)
        m_sc[...] = m_new

    @pl.when(kv == n_kv - 1)
    def _():                               # head done: normalize and project into the (tq, C) accumulator
        o_h = acc_sc[...] * pl.reciprocal(l_sc[...], approx=True)       # (tq, hs)
        y_sc[...] += jnp.dot(o_h.astype(jnp.bfloat16), wp_ref[0],
                             preferred_element_type=jnp.float32)        # (tq, C)

    @pl.when((h == n_h - 1) & (kv == n_kv - 1))
    def _():                               # all heads done: add bias, emit lane-dense (tq, C) output
        o_ref[0] = (y_sc[...] + bp_ref[...]).astype(o_ref.dtype)


# ----------------------------------------------------------------------------
# Wrapper: parameter plumbing + two pallas_calls
# ----------------------------------------------------------------------------
def causal_self_attention(x, attn_mask, w_attn, b_attn, w_proj, b_proj, n_head):
    """x: (B, T, C) f32.  attn_mask accepted for API parity with the PyTorch module but
    the kernel generates the (standard) causal mask internally.
    w_attn: (3C, C), b_attn: (3C,), w_proj: (C, C), b_proj: (C,)  (PyTorch Linear layout).
    """
    del attn_mask  # causal mask is built in-kernel (see TODO at top for arbitrary masks)

    B, T, C = x.shape
    assert C % n_head == 0
    hs = C // n_head
    assert hs % 2 == 0
    half = hs // 2
    scale = 1.0 / math.sqrt(hs)

    # --- RoPE tables (torchtune RotaryPositionalEmbeddings, base=10000),
    #     full-width (T, hs) so the kernel never slices half-lanes. ---
    theta = 1.0 / (10000.0 ** (np.arange(0, hs, 2, dtype=np.float32) / hs))      # (hs//2,)
    ang = np.arange(T, dtype=np.float32)[:, None] * theta[None, :]               # (T, hs//2)
    cos_full = jnp.asarray(np.concatenate([np.cos(ang), np.cos(ang)], 1), jnp.float32)
    sin_full = jnp.asarray(np.concatenate([np.sin(ang), np.sin(ang)], 1), jnp.float32)

    # rotate-half on de-interleaved halves as a constant matmul:  q @ R = concat(-q2, q1)
    rot = np.zeros((hs, hs), np.float32)
    rot[:half, half:] = np.eye(half, dtype=np.float32)
    rot[half:, :half] = -np.eye(half, dtype=np.float32)
    rot = jnp.asarray(rot)

    # --- per-head de-interleave permutation (evens first, then odds) of the q/k output
    #     features, applied to c_attn rows.  q.k^T is invariant under the consistent
    #     permutation; v / c_proj stay untouched, so semantics are preserved exactly. ---
    perm = np.concatenate([np.arange(0, hs, 2), np.arange(1, hs, 2)])

    w = jnp.asarray(w_attn, jnp.float32)
    b = jnp.asarray(b_attn, jnp.float32)
    wq = w[:C].reshape(n_head, hs, C)[:, perm, :] * scale       # fold 1/sqrt(hs) into q
    wk = w[C:2 * C].reshape(n_head, hs, C)[:, perm, :]
    wv = w[2 * C:].reshape(n_head, hs, C)
    bq = b[:C].reshape(n_head, hs)[:, perm] * scale
    bk = b[C:2 * C].reshape(n_head, hs)[:, perm]
    bv = b[2 * C:].reshape(n_head, hs)

    # kernel-side layouts: weights (nh, C, hs) bf16, biases (nh, 1, hs) f32
    wq_k = jnp.transpose(wq, (0, 2, 1)).astype(jnp.bfloat16)
    wk_k = jnp.transpose(wk, (0, 2, 1)).astype(jnp.bfloat16)
    wv_k = jnp.transpose(wv, (0, 2, 1)).astype(jnp.bfloat16)
    bq_k = bq[:, None, :]
    bk_k = bk[:, None, :]
    bv_k = bv[:, None, :]

    # output projection sliced per head: (nh, hs, C) -> head merge becomes a sum over h
    wp_k = jnp.transpose(jnp.asarray(w_proj, jnp.float32).reshape(C, n_head, hs),
                         (1, 2, 0)).astype(jnp.bfloat16)
    bp_k = jnp.asarray(b_proj, jnp.float32)[None, :]            # (1, C)

    # --- kernel 1: QKV projection + RoPE ---------------------------------------------
    TS = _pick_tile(T, 256)
    q, k, v = pl.pallas_call(
        _qkv_rope_kernel,
        out_shape=(jax.ShapeDtypeStruct((B, n_head, T, hs), jnp.bfloat16),
                   jax.ShapeDtypeStruct((B, n_head, T, hs), jnp.bfloat16),
                   jax.ShapeDtypeStruct((B, n_head, T, hs), jnp.bfloat16)),
        grid_spec=pltpu.PrefetchScalarGridSpec(
            num_scalar_prefetch=0,
            grid=(B, T // TS, n_head),
            in_specs=[
                pl.BlockSpec((1, TS, C), lambda b, t, h: (b, t, 0)),      # x
                pl.BlockSpec((1, C, hs), lambda b, t, h: (h, 0, 0)),      # Wq (scaled, permuted)
                pl.BlockSpec((1, C, hs), lambda b, t, h: (h, 0, 0)),      # Wk (permuted)
                pl.BlockSpec((1, C, hs), lambda b, t, h: (h, 0, 0)),      # Wv
                pl.BlockSpec((1, 1, hs), lambda b, t, h: (h, 0, 0)),      # bq
                pl.BlockSpec((1, 1, hs), lambda b, t, h: (h, 0, 0)),      # bk
                pl.BlockSpec((1, 1, hs), lambda b, t, h: (h, 0, 0)),      # bv
                pl.BlockSpec((TS, hs), lambda b, t, h: (t, 0)),           # cos (full width)
                pl.BlockSpec((TS, hs), lambda b, t, h: (t, 0)),           # sin (full width)
                pl.BlockSpec((hs, hs), lambda b, t, h: (0, 0)),           # rotate-half matrix
            ],
            out_specs=[
                pl.BlockSpec((1, 1, TS, hs), lambda b, t, h: (b, h, t, 0)),
                pl.BlockSpec((1, 1, TS, hs), lambda b, t, h: (b, h, t, 0)),
                pl.BlockSpec((1, 1, TS, hs), lambda b, t, h: (b, h, t, 0)),
            ]),
        compiler_params=pltpu.CompilerParams(
            dimension_semantics=("parallel", "parallel", "parallel")),
    )(x, wq_k, wk_k, wv_k, bq_k, bk_k, bv_k, cos_full, sin_full, rot)

    # --- kernel 2: causal flash attention + output projection -------------------------
    TQ = _pick_tile(T, 128)
    TK = _pick_tile(T, 128)
    kernel2 = partial(_flash_proj_kernel, tq=TQ, tk=TK)
    out = pl.pallas_call(
        kernel2,
        out_shape=jax.ShapeDtypeStruct((B, T, C), x.dtype),
        grid_spec=pltpu.PrefetchScalarGridSpec(
            num_scalar_prefetch=0,
            grid=(B, T // TQ, n_head, T // TK),
            in_specs=[
                pl.BlockSpec((1, 1, TQ, hs), lambda b, qi, h, kv: (b, h, qi, 0)),  # q
                pl.BlockSpec((1, 1, TK, hs), lambda b, qi, h, kv: (b, h, kv, 0)),  # k
                pl.BlockSpec((1, 1, TK, hs), lambda b, qi, h, kv: (b, h, kv, 0)),  # v
                pl.BlockSpec((1, hs, C), lambda b, qi, h, kv: (h, 0, 0)),          # Wproj per head
                pl.BlockSpec((1, C), lambda b, qi, h, kv: (0, 0)),                 # bproj
            ],
            out_specs=pl.BlockSpec((1, TQ, C), lambda b, qi, h, kv: (b, qi, 0)),
            scratch_shapes=[
                pltpu.VMEM((TQ, 1), jnp.float32),    # running max
                pltpu.VMEM((TQ, 1), jnp.float32),    # running denominator
                pltpu.VMEM((TQ, hs), jnp.float32),   # per-head PV accumulator
                pltpu.VMEM((TQ, C), jnp.float32),    # merged-head / projection accumulator
            ]),
        compiler_params=pltpu.CompilerParams(
            dimension_semantics=("parallel", "parallel", "arbitrary", "arbitrary")),
    )(q, k, v, wp_k, bp_k)
    return out


# ----------------------------------------------------------------------------
# Pure-JAX reference (mirrors the PyTorch module, unpermuted weights, f32)
# ----------------------------------------------------------------------------
def _rope_ref(x, cos, sin):  # x: (B, T, nh, hs), interleaved pairs (torchtune)
    B, T, nh, hs = x.shape
    xs = x.reshape(B, T, nh, hs // 2, 2)
    x1, x2 = xs[..., 0], xs[..., 1]
    c = cos[None, :, None, :]
    s = sin[None, :, None, :]
    out = jnp.stack([x1 * c - x2 * s, x2 * c + x1 * s], axis=-1)
    return out.reshape(B, T, nh, hs)


def _ref_forward(x, mask, w_attn, b_attn, w_proj, b_proj, n_head):
    B, T, C = x.shape
    hs = C // n_head
    theta = 1.0 / (10000.0 ** (jnp.arange(0, hs, 2, dtype=jnp.float32) / hs))
    ang = jnp.arange(T, dtype=jnp.float32)[:, None] * theta[None, :]
    cos, sin = jnp.cos(ang), jnp.sin(ang)

    qkv = x @ w_attn.T + b_attn
    q, k, v = jnp.split(qkv, 3, axis=-1)
    q = q.reshape(B, T, n_head, hs)
    k = k.reshape(B, T, n_head, hs)
    v = v.reshape(B, T, n_head, hs).transpose(0, 2, 1, 3)
    q = _rope_ref(q, cos, sin).transpose(0, 2, 1, 3)
    k = _rope_ref(k, cos, sin).transpose(0, 2, 1, 3)
    s = jnp.einsum('bhtd,bhsd->bhts', q, k) / math.sqrt(hs)
    s = jnp.where(mask > 0.0, s, -jnp.inf)
    p = jax.nn.softmax(s, axis=-1)
    y = jnp.einsum('bhts,bhsd->bhtd', p, v)
    y = y.transpose(0, 2, 1, 3).reshape(B, T, C)
    return y @ w_proj.T + b_proj


# ----------------------------------------------------------------------------
if __name__ == "__main__":
    B, T, n_head, C = 2, 8, 4, 32     # head_size = 8

    key = jax.random.PRNGKey(0)
    kx, kw1, kb1, kw2, kb2 = jax.random.split(key, 5)

    x = jax.random.normal(kx, (B, T, C), dtype=jnp.float32)
    w_attn = 0.02 * jax.random.normal(kw1, (3 * C, C), dtype=jnp.float32)   # c_attn.weight
    b_attn = 0.02 * jax.random.normal(kb1, (3 * C,), dtype=jnp.float32)     # c_attn.bias
    w_proj = 0.02 * jax.random.normal(kw2, (C, C), dtype=jnp.float32)       # c_proj.weight
    b_proj = 0.02 * jax.random.normal(kb2, (C,), dtype=jnp.float32)         # c_proj.bias

    # causal attention mask (1 = attend); only used by the pure-JAX reference —
    # the Pallas kernel generates the causal mask internally.
    causal = np.tril(np.ones((T, T), dtype=np.float32))
    attn_mask = jnp.asarray(np.broadcast_to(causal, (B, 1, T, T)).copy())

    out = causal_self_attention(x, attn_mask, w_attn, b_attn, w_proj, b_proj, n_head)
    out = jax.block_until_ready(out)

    ref = _ref_forward(x, attn_mask, w_attn, b_attn, w_proj, b_proj, n_head)
    assert out.shape == (B, T, C)
    assert np.allclose(np.asarray(out), np.asarray(ref), rtol=2e-2, atol=2e-2), (
        float(np.max(np.abs(np.asarray(out) - np.asarray(ref)))))

    print("KERNEL_OK")
</pallas_src>

<mosaic_0001>
module attributes {stable_mosaic.version = 11 : i64} {
  func.func @_qkv_rope_kernel(%arg0: i32, %arg1: i32, %arg2: i32, %arg3: memref<1x8x32xf32, #tpu.memory_space<vmem>>, %arg4: memref<1x32x8xbf16, #tpu.memory_space<vmem>>, %arg5: memref<1x32x8xbf16, #tpu.memory_space<vmem>>, %arg6: memref<1x32x8xbf16, #tpu.memory_space<vmem>>, %arg7: memref<1x1x8xf32, #tpu.memory_space<vmem>>, %arg8: memref<1x1x8xf32, #tpu.memory_space<vmem>>, %arg9: memref<1x1x8xf32, #tpu.memory_space<vmem>>, %arg10: memref<8x8xf32, #tpu.memory_space<vmem>>, %arg11: memref<8x8xf32, #tpu.memory_space<vmem>>, %arg12: memref<8x8xf32, #tpu.memory_space<vmem>>, %arg13: memref<1x1x8x8xbf16, #tpu.memory_space<vmem>>, %arg14: memref<1x1x8x8xbf16, #tpu.memory_space<vmem>>, %arg15: memref<1x1x8x8xbf16, #tpu.memory_space<vmem>>) attributes {dimension_semantics = [#tpu.dimension_semantics<parallel>, #tpu.dimension_semantics<parallel>, #tpu.dimension_semantics<parallel>], iteration_bounds = array<i64: 2, 1, 4>, scalar_prefetch = 0 : i64, scratch_operands = 0 : i64, tpu.core_type = #tpu.core_type<tc>, window_params = [{transform_indices = @transform_0, window_bounds = array<i64: 1, 8, 32>}, {transform_indices = @transform_1, window_bounds = array<i64: 1, 32, 8>}, {transform_indices = @transform_2, window_bounds = array<i64: 1, 32, 8>}, {transform_indices = @transform_3, window_bounds = array<i64: 1, 32, 8>}, {transform_indices = @transform_4, window_bounds = array<i64: 1, 1, 8>}, {transform_indices = @transform_5, window_bounds = array<i64: 1, 1, 8>}, {transform_indices = @transform_6, window_bounds = array<i64: 1, 1, 8>}, {transform_indices = @transform_7, window_bounds = array<i64: 8, 8>}, {transform_indices = @transform_8, window_bounds = array<i64: 8, 8>}, {pipeline_mode = #tpu.pipeline_mode<synchronous>, transform_indices = @transform_9, window_bounds = array<i64: 8, 8>}, {transform_indices = @transform_10, window_bounds = array<i64: 1, 1, 8, 8>}, {transform_indices = @transform_11, window_bounds = array<i64: 1, 1, 8, 8>}, {transform_indices = @transform_12, window_bounds = array<i64: 1, 1, 8, 8>}]} {
    %c0 = arith.constant 0 : index
    %c0_0 = arith.constant 0 : index
    %c0_1 = arith.constant 0 : index
    %0 = vector.load %arg3[%c0, %c0_0, %c0_1] : memref<1x8x32xf32, #tpu.memory_space<vmem>>, vector<1x8x32xf32>
    %1 = vector.shape_cast %0 : vector<1x8x32xf32> to vector<8x32xf32>
    %2 = arith.truncf %1 : vector<8x32xf32> to vector<8x32xbf16>
    %c0_2 = arith.constant 0 : index
    %c0_3 = arith.constant 0 : index
    %c0_4 = arith.constant 0 : index
    %3 = vector.load %arg4[%c0_2, %c0_3, %c0_4] : memref<1x32x8xbf16, #tpu.memory_space<vmem>>, vector<1x32x8xbf16>
    %4 = vector.shape_cast %3 : vector<1x32x8xbf16> to vector<32x8xbf16>
    %cst = arith.constant dense<0.000000e+00> : vector<8x8xf32>
    %5 = tpu.matmul %2, %4, %cst {dimension_numbers = #tpu.dot_dimension_numbers<[1], [0], [0], [1], [0, 0, 1, 1], [], []>} : vector<8x32xbf16>, vector<32x8xbf16>, vector<8x8xf32> -> vector<8x8xf32>
    %c0_5 = arith.constant 0 : index
    %c0_6 = arith.constant 0 : index
    %c0_7 = arith.constant 0 : index
    %6 = vector.load %arg7[%c0_5, %c0_6, %c0_7] : memref<1x1x8xf32, #tpu.memory_space<vmem>>, vector<1x1x8xf32>
    %7 = vector.shape_cast %6 : vector<1x1x8xf32> to vector<1x8xf32>
    %8 = vector.broadcast %7 : vector<1x8xf32> to vector<8x8xf32>
    %9 = arith.addf %5, %8 : vector<8x8xf32>
    %c0_8 = arith.constant 0 : index
    %c0_9 = arith.constant 0 : index
    %c0_10 = arith.constant 0 : index
    %10 = vector.load %arg5[%c0_8, %c0_9, %c0_10] : memref<1x32x8xbf16, #tpu.memory_space<vmem>>, vector<1x32x8xbf16>
    %11 = vector.shape_cast %10 : vector<1x32x8xbf16> to vector<32x8xbf16>
    %cst_11 = arith.constant dense<0.000000e+00> : vector<8x8xf32>
    %12 = tpu.matmul %2, %11, %cst_11 {dimension_numbers = #tpu.dot_dimension_numbers<[1], [0], [0], [1], [0, 0, 1, 1], [], []>} : vector<8x32xbf16>, vector<32x8xbf16>, vector<8x8xf32> -> vector<8x8xf32>
    %c0_12 = arith.constant 0 : index
    %c0_13 = arith.constant 0 : index
    %c0_14 = arith.constant 0 : index
    %13 = vector.load %arg8[%c0_12, %c0_13, %c0_14] : memref<1x1x8xf32, #tpu.memory_space<vmem>>, vector<1x1x8xf32>
    %14 = vector.shape_cast %13 : vector<1x1x8xf32> to vector<1x8xf32>
    %15 = vector.broadcast %14 : vector<1x8xf32> to vector<8x8xf32>
    %16 = arith.addf %12, %15 : vector<8x8xf32>
    %c0_15 = arith.constant 0 : index
    %c0_16 = arith.constant 0 : index
    %c0_17 = arith.constant 0 : index
    %17 = vector.load %arg6[%c0_15, %c0_16, %c0_17] : memref<1x32x8xbf16, #tpu.memory_space<vmem>>, vector<1x32x8xbf16>
    %18 = vector.shape_cast %17 : vector<1x32x8xbf16> to vector<32x8xbf16>
    %cst_18 = arith.constant dense<0.000000e+00> : vector<8x8xf32>
    %19 = tpu.matmul %2, %18, %cst_18 {dimension_numbers = #tpu.dot_dimension_numbers<[1], [0], [0], [1], [0, 0, 1, 1], [], []>} : vector<8x32xbf16>, vector<32x8xbf16>, vector<8x8xf32> -> vector<8x8xf32>
    %c0_19 = arith.constant 0 : index
    %c0_20 = arith.constant 0 : index
    %c0_21 = arith.constant 0 : index
    %20 = vector.load %arg9[%c0_19, %c0_20, %c0_21] : memref<1x1x8xf32, #tpu.memory_space<vmem>>, vector<1x1x8xf32>
    %21 = vector.shape_cast %20 : vector<1x1x8xf32> to vector<1x8xf32>
    %22 = vector.broadcast %21 : vector<1x8xf32> to vector<8x8xf32>
    %23 = arith.addf %19, %22 : vector<8x8xf32>
    %c0_22 = arith.constant 0 : index
    %c0_23 = arith.constant 0 : index
    %24 = vector.load %arg10[%c0_22, %c0_23] : memref<8x8xf32, #tpu.memory_space<vmem>>, vector<8x8xf32>
    %c0_24 = arith.constant 0 : index
    %c0_25 = arith.constant 0 : index
    %25 = vector.load %arg11[%c0_24, %c0_25] : memref<8x8xf32, #tpu.memory_space<vmem>>, vector<8x8xf32>
    %c0_26 = arith.constant 0 : index
    %c0_27 = arith.constant 0 : index
    %26 = vector.load %arg12[%c0_26, %c0_27] : memref<8x8xf32, #tpu.memory_space<vmem>>, vector<8x8xf32>
    %cst_28 = arith.constant dense<0.000000e+00> : vector<8x8xf32>
    %27 = tpu.matmul %9, %26, %cst_28 {dimension_numbers = #tpu.dot_dimension_numbers<[1], [0], [0], [1], [0, 0, 1, 1], [], []>} : vector<8x8xf32>, vector<8x8xf32>, vector<8x8xf32> -> vector<8x8xf32>
    %cst_29 = arith.constant dense<0.000000e+00> : vector<8x8xf32>
    %28 = tpu.matmul %16, %26, %cst_29 {dimension_numbers = #tpu.dot_dimension_numbers<[1], [0], [0], [1], [0, 0, 1, 1], [], []>} : vector<8x8xf32>, vector<8x8xf32>, vector<8x8xf32> -> vector<8x8xf32>
    %29 = arith.mulf %9, %24 : vector<8x8xf32>
    %30 = arith.mulf %27, %25 : vector<8x8xf32>
    %31 = arith.addf %29, %30 : vector<8x8xf32>
    %32 = arith.truncf %31 : vector<8x8xf32> to vector<8x8xbf16>
    %c0_30 = arith.constant 0 : index
    %c0_31 = arith.constant 0 : index
    %c0_32 = arith.constant 0 : index
    %c0_33 = arith.constant 0 : index
    %33 = vector.load %arg13[%c0_30, %c0_31, %c0_32, %c0_33] : memref<1x1x8x8xbf16, #tpu.memory_space<vmem>>, vector<1x1x8x8xbf16>
    %34 = vector.shape_cast %33 : vector<1x1x8x8xbf16> to vector<8x8xbf16>
    %35 = vector.shape_cast %32 : vector<8x8xbf16> to vector<1x1x8x8xbf16>
    tpu.vector_store %arg13[%c0_30, %c0_31, %c0_32, %c0_33], %35 {strides = array<i32>} : memref<1x1x8x8xbf16, #tpu.memory_space<vmem>>, vector<1x1x8x8xbf16>,
    %36 = arith.mulf %16, %24 : vector<8x8xf32>
    %37 = arith.mulf %28, %25 : vector<8x8xf32>
    %38 = arith.addf %36, %37 : vector<8x8xf32>
    %39 = arith.truncf %38 : vector<8x8xf32> to vector<8x8xbf16>
    %c0_34 = arith.constant 0 : index
    %c0_35 = arith.constant 0 : index
    %c0_36 = arith.constant 0 : index
    %c0_37 = arith.constant 0 : index
    %40 = vector.load %arg14[%c0_34, %c0_35, %c0_36, %c0_37] : memref<1x1x8x8xbf16, #tpu.memory_space<vmem>>, vector<1x1x8x8xbf16>
    %41 = vector.shape_cast %40 : vector<1x1x8x8xbf16> to vector<8x8xbf16>
    %42 = vector.shape_cast %39 : vector<8x8xbf16> to vector<1x1x8x8xbf16>
    tpu.vector_store %arg14[%c0_34, %c0_35, %c0_36, %c0_37], %42 {strides = array<i32>} : memref<1x1x8x8xbf16, #tpu.memory_space<vmem>>, vector<1x1x8x8xbf16>,
    %43 = arith.truncf %23 : vector<8x8xf32> to vector<8x8xbf16>
    %c0_38 = arith.constant 0 : index
    %c0_39 = arith.constant 0 : index
    %c0_40 = arith.constant 0 : index
    %c0_41 = arith.constant 0 : index
    %44 = vector.load %arg15[%c0_38, %c0_39, %c0_40, %c0_41] : memref<1x1x8x8xbf16, #tpu.memory_space<vmem>>, vector<1x1x8x8xbf16>
    %45 = vector.shape_cast %44 : vector<1x1x8x8xbf16> to vector<8x8xbf16>
    %46 = vector.shape_cast %43 : vector<8x8xbf16> to vector<1x1x8x8xbf16>
    tpu.vector_store %arg15[%c0_38, %c0_39, %c0_40, %c0_41], %46 {strides = array<i32>} : memref<1x1x8x8xbf16, #tpu.memory_space<vmem>>, vector<1x1x8x8xbf16>,
    return
  }
  func.func @transform_0(%arg0: i32, %arg1: i32, %arg2: i32) -> (i32, i32, i32) {
    %c0_i32 = arith.constant 0 : i32
    %c0_i32_0 = arith.constant 0 : i32
    return %arg0, %arg1, %c0_i32 : i32, i32, i32
  }
  func.func @transform_1(%arg0: i32, %arg1: i32, %arg2: i32) -> (i32, i32, i32) {
    %c0_i32 = arith.constant 0 : i32
    %c0_i32_0 = arith.constant 0 : i32
    %c0_i32_1 = arith.constant 0 : i32
    return %arg2, %c0_i32, %c0_i32_0 : i32, i32, i32
  }
  func.func @transform_2(%arg0: i32, %arg1: i32, %arg2: i32) -> (i32, i32, i32) {
    %c0_i32 = arith.constant 0 : i32
    %c0_i32_0 = arith.constant 0 : i32
    %c0_i32_1 = arith.constant 0 : i32
    return %arg2, %c0_i32, %c0_i32_0 : i32, i32, i32
  }
  func.func @transform_3(%arg0: i32, %arg1: i32, %arg2: i32) -> (i32, i32, i32) {
    %c0_i32 = arith.constant 0 : i32
    %c0_i32_0 = arith.constant 0 : i32
    %c0_i32_1 = arith.constant 0 : i32
    return %arg2, %c0_i32, %c0_i32_0 : i32, i32, i32
  }
  func.func @transform_4(%arg0: i32, %arg1: i32, %arg2: i32) -> (i32, i32, i32) {
    %c0_i32 = arith.constant 0 : i32
    %c0_i32_0 = arith.constant 0 : i32
    %c0_i32_1 = arith.constant 0 : i32
    return %arg2, %c0_i32, %c0_i32_0 : i32, i32, i32
  }
  func.func @transform_5(%arg0: i32, %arg1: i32, %arg2: i32) -> (i32, i32, i32) {
    %c0_i32 = arith.constant 0 : i32
    %c0_i32_0 = arith.constant 0 : i32
    %c0_i32_1 = arith.constant 0 : i32
    return %arg2, %c0_i32, %c0_i32_0 : i32, i32, i32
  }
  func.func @transform_6(%arg0: i32, %arg1: i32, %arg2: i32) -> (i32, i32, i32) {
    %c0_i32 = arith.constant 0 : i32
    %c0_i32_0 = arith.constant 0 : i32
    %c0_i32_1 = arith.constant 0 : i32
    return %arg2, %c0_i32, %c0_i32_0 : i32, i32, i32
  }
  func.func @transform_7(%arg0: i32, %arg1: i32, %arg2: i32) -> (i32, i32) {
    %c0_i32 = arith.constant 0 : i32
    %c0_i32_0 = arith.constant 0 : i32
    return %arg1, %c0_i32 : i32, i32
  }
  func.func @transform_8(%arg0: i32, %arg1: i32, %arg2: i32) -> (i32, i32) {
    %c0_i32 = arith.constant 0 : i32
    %c0_i32_0 = arith.constant 0 : i32
    return %arg1, %c0_i32 : i32, i32
  }
  func.func @transform_9(%arg0: i32, %arg1: i32, %arg2: i32) -> (i32, i32) {
    %c0_i32 = arith.constant 0 : i32
    %c0_i32_0 = arith.constant 0 : i32
    %c0_i32_1 = arith.constant 0 : i32
    return %c0_i32, %c0_i32_0 : i32, i32
  }
  func.func @transform_10(%arg0: i32, %arg1: i32, %arg2: i32) -> (i32, i32, i32, i32) {
    %c0_i32 = arith.constant 0 : i32
    %c0_i32_0 = arith.constant 0 : i32
    return %arg0, %arg2, %arg1, %c0_i32 : i32, i32, i32, i32
  }
  func.func @transform_11(%arg0: i32, %arg1: i32, %arg2: i32) -> (i32, i32, i32, i32) {
    %c0_i32 = arith.constant 0 : i32
    %c0_i32_0 = arith.constant 0 : i32
    return %arg0, %arg2, %arg1, %c0_i32 : i32, i32, i32, i32
  }
  func.func @transform_12(%arg0: i32, %arg1: i32, %arg2: i32) -> (i32, i32, i32, i32) {
    %c0_i32 = arith.constant 0 : i32
    %c0_i32_0 = arith.constant 0 : i32
    return %arg0, %arg2, %arg1, %c0_i32 : i32, i32, i32, i32
  }
}

</mosaic_0001>

<llo_original>
// kernel: tpu_custom_call.1
$region0: #{tpu_custom_call.1}
  #allocation0 [shape = 'u32[]', space=smem, size = 0x4, offset = 0x4, fixed_abs, tag = 'smem constant byte address 0x4 - core index']
  #allocation1 [shape = 'u32[144,128]{1,0:T(1,128)}', space=vmem, size = 0x12000, scoped, tag = 'internal scratch']
  %s0 = inlined_call_operand.vmem [shape: f32[2,8,32], index: 0, kind: input, shape index: {}]
  %s1 = inlined_call_operand.vmem [shape: bf16[4,32,8], index: 1, kind: input, shape index: {}]
  %s2 = inlined_call_operand.vmem [shape: bf16[4,32,8], index: 2, kind: input, shape index: {}]
  %s3 = inlined_call_operand.vmem [shape: bf16[4,32,8], index: 3, kind: input, shape index: {}]
  %s4 = inlined_call_operand.vmem [shape: f32[4,1,8], index: 4, kind: input, shape index: {}]
  %s5 = inlined_call_operand.vmem [shape: f32[4,1,8], index: 5, kind: input, shape index: {}]
  %s6 = inlined_call_operand.vmem [shape: f32[4,1,8], index: 6, kind: input, shape index: {}]
  %s7 = inlined_call_operand.vmem [shape: f32[8,8], index: 7, kind: input, shape index: {}]
  %s8 = inlined_call_operand.vmem [shape: f32[8,8], index: 8, kind: input, shape index: {}]
  %s9 = inlined_call_operand.vmem [shape: f32[8,8], index: 9, kind: input, shape index: {}]
  %s10 = inlined_call_operand.hbm [shape: bf16[2,4,8,8], index: 10, kind: output, shape index: {0}]
  %s11 = inlined_call_operand.hbm [shape: bf16[2,4,8,8], index: 11, kind: output, shape index: {1}]
  %s12 = inlined_call_operand.hbm [shape: bf16[2,4,8,8], index: 12, kind: output, shape index: {2}]
  %13 = xla_tuple %s10, %s11, %s12
  %s14 = sld [smem:[#allocation0]]
  $region89: #{tpu_custom_call.1} parent=0
    _
  %s16 = ssub.s32 1, %s14
  %s17 = scalar_select 0, %s16, %s14
  $region1: #{tpu_custom_call.1} parent=0
    #allocation2 [shape = 'u8[4096]{0}', space=vmem, size = 0x1000, scoped, tag = 'output window, operand 0']
    #allocation3 [shape = 's32[2]{0}', space=sflag, size = 0x8, scoped, tag = 'scoped memory for tpu_custom_call.1']
    #allocation4 [shape = 'u8[4096]{0}', space=vmem, size = 0x1000, scoped, tag = 'output window, operand 1']
    #allocation5 [shape = 's32[2]{0}', space=sflag, size = 0x8, scoped, tag = 'scoped memory for tpu_custom_call.1']
    #allocation6 [shape = 'u8[4096]{0}', space=vmem, size = 0x1000, scoped, tag = 'output window, operand 2']
    %18 = vsyncpa [#allocation3], 0
    %s19 = scalar_lea.sflag [#allocation3], 1
    %20 = vsyncpa %s19, 0
    %21 = vsyncpa [#allocation5], 0
    %s22 = scalar_lea.sflag [#allocation5], 1
    %23 = vsyncpa %s22, 0
    loop: start=0, step=1, limit=10
    $region2: #{tpu_custom_call.1} parent=1 // loop_pre_header
      _
    $region3: #{tpu_custom_call.1} parent=1 // loop_header
      %s25 = sphi 0, %s29
      %p26 = scmp.ge.s32.totalorder %s25, 10
      %s32 = sphi 0, %s51
      %s33 = sphi 0, %s47
      %s34 = sphi 0, %s43
      %s35 = sphi 0, %s32
      %s36 = sphi 0, %s33
      %s37 = sphi 0, %s34
      %s38 = sphi 0, %s35
      %s39 = sphi 0, %s36
      %s40 = sphi 0, %s37
      %s56 = sphi 0, %s58
      %s59 = sphi 0, %s56
      %s60 = sphi 0, %s59
      %s76 = sphi 0, %s60
      %s82 = sphi 0, %s84
      %s85 = sphi 0, %s82
      %s86 = sphi 0, %s85
      %s102 = sphi 0, %s86
      %s108 = sphi 0, %s110
      %s111 = sphi 0, %s108
      %s112 = sphi 0, %s111
      %s128 = sphi 0, %s112
      %s134 = sphi 0, %s136
      %s137 = sphi 0, %s134
      %s138 = sphi 0, %s137
      %s154 = sphi 0, %s138
      %s160 = sphi 0, %s162
      %s163 = sphi 0, %s160
      %s164 = sphi 0, %s163
      %s180 = sphi 0, %s164
      %s186 = sphi 0, %s188
      %s189 = sphi 0, %s186
      %s190 = sphi 0, %s189
      %s206 = sphi 0, %s190
      %s212 = sphi 0, %s214
      %s215 = sphi 0, %s212
      %s216 = sphi 0, %s215
      %s232 = sphi 0, %s216
      %s238 = sphi 0, %s240
      %s241 = sphi 0, %s238
      %s242 = sphi 0, %s241
      %s258 = sphi 0, %s242
      %s264 = sphi 0, %s266
      %s267 = sphi 0, %s264
      %s268 = sphi 0, %s267
      %s284 = sphi 0, %s268
      %s288 = sphi 0, %s288
      %s290 = sphi 0, %s288
      %s291 = sphi 0, %s290
      %s305 = sphi 0, %s291
      %s315 = sphi 0, %s317
      %s318 = sphi 0, %s315
      %s319 = sphi 0, %s318
      %s335 = sphi 0, %s319
      %s345 = sphi 0, %s347
      %s348 = sphi 0, %s345
      %s349 = sphi 0, %s348
      %s365 = sphi 0, %s349
      %s375 = sphi 0, %s377
      %s378 = sphi 0, %s375
      %s379 = sphi 0, %s378
      %s395 = sphi 0, %s379
    $region4: #{tpu_custom_call.1} parent=1 // loop_header_branch
      %28 = sbr.rel (%p26) target = $region8
    $region5: #{tpu_custom_call.1} parent=1 // loop_body
      %s30 = ssub.s32 %s25, 1
      %s31 = ssub.s32 %s25, 2
      %s41 = sadd.s32 1, %s34
      %p42 = scmp.ge.s32.totalorder %s41, 4
      %s43 = scalar_select %p42, 0, %s41
      %s44 = sadd.s32 1, %s33
      %s45 = scalar_select %p42, %s44, %s33
      %p46 = scmp.ge.s32.totalorder %s45, 1
      %s47 = scalar_select %p46, 0, %s45
      %s48 = sadd.s32 1, %s32
      %s49 = scalar_select %p46, %s48, %s32
      %p50 = scmp.ge.s32.totalorder %s49, 2
      %s51 = scalar_select %p50, 0, %s49
      %s52 = ssub.s32 %s32, %s51
      %s53 = ssub.s32 %s33, %s47
      %s54 = sor.u32 %s52, %s53
      %p55 = scmp.eq.s32.totalorder %s54, 0
      %s57 = sadd.s32 %s56, 1
      %s58 = scalar_select %p55, %s56, %s57
      %p61 = pneg %p55
      %p62 = scmp.eq.s32.totalorder %s25, 7
      %p63 = por %p61, %p62
      %p64 = scmp.ne.s32.totalorder %s56, %s59
      %p65 = scmp.eq.s32.totalorder %s25, 0
      %p66 = por %p64, %p65
      %p67 = scmp.ne.s32.totalorder %s56, %s59
      %p68 = scmp.eq.s32.totalorder %s30, 7
      %p69 = por %p67, %p68
      %p70 = scmp.ne.s32.totalorder %s59, %s60
      %p71 = scmp.eq.s32.totalorder %s30, 0
      %p72 = por %p70, %p71
      %p73 = scmp.ne.s32.totalorder %s59, %s60
      %p74 = scmp.eq.s32.totalorder %s31, 7
      %p75 = por %p73, %p74
      %p77 = scmp.ne.s32.totalorder %s60, %s76
      %p78 = scmp.eq.s32.totalorder %s31, 0
      %p79 = por %p77, %p78
      %s80 = ssub.s32 %s34, %s43
      %p81 = scmp.eq.s32.totalorder %s80, 0
      %s83 = sadd.s32 %s82, 1
      %s84 = scalar_select %p81, %s82, %s83
      %p87 = pneg %p81
      %p88 = scmp.eq.s32.totalorder %s25, 7
      %p89 = por %p87, %p88
      %p90 = scmp.ne.s32.totalorder %s82, %s85
      %p91 = scmp.eq.s32.totalorder %s25, 0
      %p92 = por %p90, %p91
      %p93 = scmp.ne.s32.totalorder %s82, %s85
      %p94 = scmp.eq.s32.totalorder %s30, 7
      %p95 = por %p93, %p94
      %p96 = scmp.ne.s32.totalorder %s85, %s86
      %p97 = scmp.eq.s32.totalorder %s30, 0
      %p98 = por %p96, %p97
      %p99 = scmp.ne.s32.totalorder %s85, %s86
      %p100 = scmp.eq.s32.totalorder %s31, 7
      %p101 = por %p99, %p100
      %p103 = scmp.ne.s32.totalorder %s86, %s102
      %p104 = scmp.eq.s32.totalorder %s31, 0
      %p105 = por %p103, %p104
      %s106 = ssub.s32 %s34, %s43
      %p107 = scmp.eq.s32.totalorder %s106, 0
      %s109 = sadd.s32 %s108, 1
      %s110 = scalar_select %p107, %s108, %s109
      %p113 = pneg %p107
      %p114 = scmp.eq.s32.totalorder %s25, 7
      %p115 = por %p113, %p114
      %p116 = scmp.ne.s32.totalorder %s108, %s111
      %p117 = scmp.eq.s32.totalorder %s25, 0
      %p118 = por %p116, %p117
      %p119 = scmp.ne.s32.totalorder %s108, %s111
      %p120 = scmp.eq.s32.totalorder %s30, 7
      %p121 = por %p119, %p120
      %p122 = scmp.ne.s32.totalorder %s111, %s112
      %p123 = scmp.eq.s32.totalorder %s30, 0
      %p124 = por %p122, %p123
      %p125 = scmp.ne.s32.totalorder %s111, %s112
      %p126 = scmp.eq.s32.totalorder %s31, 7
      %p127 = por %p125, %p126
      %p129 = scmp.ne.s32.totalorder %s112, %s128
      %p130 = scmp.eq.s32.totalorder %s31, 0
      %p131 = por %p129, %p130
      %s132 = ssub.s32 %s34, %s43
      %p133 = scmp.eq.s32.totalorder %s132, 0
      %s135 = sadd.s32 %s134, 1
      %s136 = scalar_select %p133, %s134, %s135
      %p139 = pneg %p133
      %p140 = scmp.eq.s32.totalorder %s25, 7
      %p141 = por %p139, %p140
      %p142 = scmp.ne.s32.totalorder %s134, %s137
      %p143 = scmp.eq.s32.totalorder %s25, 0
      %p144 = por %p142, %p143
      %p145 = scmp.ne.s32.totalorder %s134, %s137
      %p146 = scmp.eq.s32.totalorder %s30, 7
      %p147 = por %p145, %p146
      %p148 = scmp.ne.s32.totalorder %s137, %s138
      %p149 = scmp.eq.s32.totalorder %s30, 0
      %p150 = por %p148, %p149
      %p151 = scmp.ne.s32.totalorder %s137, %s138
      %p152 = scmp.eq.s32.totalorder %s31, 7
      %p153 = por %p151, %p152
      %p155 = scmp.ne.s32.totalorder %s138, %s154
      %p156 = scmp.eq.s32.totalorder %s31, 0
      %p157 = por %p155, %p156
      %s158 = ssub.s32 %s34, %s43
      %p159 = scmp.eq.s32.totalorder %s158, 0
      %s161 = sadd.s32 %s160, 1
      %s162 = scalar_select %p159, %s160, %s161
      %p165 = pneg %p159
      %p166 = scmp.eq.s32.totalorder %s25, 7
      %p167 = por %p165, %p166
      %p168 = scmp.ne.s32.totalorder %s160, %s163
      %p169 = scmp.eq.s32.totalorder %s25, 0
      %p170 = por %p168, %p169
      %p171 = scmp.ne.s32.totalorder %s160, %s163
      %p172 = scmp.eq.s32.totalorder %s30, 7
      %p173 = por %p171, %p172
      %p174 = scmp.ne.s32.totalorder %s163, %s164
      %p175 = scmp.eq.s32.totalorder %s30, 0
      %p176 = por %p174, %p175
      %p177 = scmp.ne.s32.totalorder %s163, %s164
      %p178 = scmp.eq.s32.totalorder %s31, 7
      %p179 = por %p177, %p178
      %p181 = scmp.ne.s32.totalorder %s164, %s180
      %p182 = scmp.eq.s32.totalorder %s31, 0
      %p183 = por %p181, %p182
      %s184 = ssub.s32 %s34, %s43
      %p185 = scmp.eq.s32.totalorder %s184, 0
      %s187 = sadd.s32 %s186, 1
      %s188 = scalar_select %p185, %s186, %s187
      %p191 = pneg %p185
      %p192 = scmp.eq.s32.totalorder %s25, 7
      %p193 = por %p191, %p192
      %p194 = scmp.ne.s32.totalorder %s186, %s189
      %p195 = scmp.eq.s32.totalorder %s25, 0
      %p196 = por %p194, %p195
      %p197 = scmp.ne.s32.totalorder %s186, %s189
      %p198 = scmp.eq.s32.totalorder %s30, 7
      %p199 = por %p197, %p198
      %p200 = scmp.ne.s32.totalorder %s189, %s190
      %p201 = scmp.eq.s32.totalorder %s30, 0
      %p202 = por %p200, %p201
      %p203 = scmp.ne.s32.totalorder %s189, %s190
      %p204 = scmp.eq.s32.totalorder %s31, 7
      %p205 = por %p203, %p204
      %p207 = scmp.ne.s32.totalorder %s190, %s206
      %p208 = scmp.eq.s32.totalorder %s31, 0
      %p209 = por %p207, %p208
      %s210 = ssub.s32 %s34, %s43
      %p211 = scmp.eq.s32.totalorder %s210, 0
      %s213 = sadd.s32 %s212, 1
      %s214 = scalar_select %p211, %s212, %s213
      %p217 = pneg %p211
      %p218 = scmp.eq.s32.totalorder %s25, 7
      %p219 = por %p217, %p218
      %p220 = scmp.ne.s32.totalorder %s212, %s215
      %p221 = scmp.eq.s32.totalorder %s25, 0
      %p222 = por %p220, %p221
      %p223 = scmp.ne.s32.totalorder %s212, %s215
      %p224 = scmp.eq.s32.totalorder %s30, 7
      %p225 = por %p223, %p224
      %p226 = scmp.ne.s32.totalorder %s215, %s216
      %p227 = scmp.eq.s32.totalorder %s30, 0
      %p228 = por %p226, %p227
      %p229 = scmp.ne.s32.totalorder %s215, %s216
      %p230 = scmp.eq.s32.totalorder %s31, 7
      %p231 = por %p229, %p230
      %p233 = scmp.ne.s32.totalorder %s216, %s232
      %p234 = scmp.eq.s32.totalorder %s31, 0
      %p235 = por %p233, %p234
      %s236 = ssub.s32 %s33, %s47
      %p237 = scmp.eq.s32.totalorder %s236, 0
      %s239 = sadd.s32 %s238, 1
      %s240 = scalar_select %p237, %s238, %s239
      %p243 = pneg %p237
      %p244 = scmp.eq.s32.totalorder %s25, 7
      %p245 = por %p243, %p244
      %p246 = scmp.ne.s32.totalorder %s238, %s241
      %p247 = scmp.eq.s32.totalorder %s25, 0
      %p248 = por %p246, %p247
      %p249 = scmp.ne.s32.totalorder %s238, %s241
      %p250 = scmp.eq.s32.totalorder %s30, 7
      %p251 = por %p249, %p250
      %p252 = scmp.ne.s32.totalorder %s241, %s242
      %p253 = scmp.eq.s32.totalorder %s30, 0
      %p254 = por %p252, %p253
      %p255 = scmp.ne.s32.totalorder %s241, %s242
      %p256 = scmp.eq.s32.totalorder %s31, 7
      %p257 = por %p255, %p256
      %p259 = scmp.ne.s32.totalorder %s242, %s258
      %p260 = scmp.eq.s32.totalorder %s31, 0
      %p261 = por %p259, %p260
      %s262 = ssub.s32 %s33, %s47
      %p263 = scmp.eq.s32.totalorder %s262, 0
      %s265 = sadd.s32 %s264, 1
      %s266 = scalar_select %p263, %s264, %s265
      %p269 = pneg %p263
      %p270 = scmp.eq.s32.totalorder %s25, 7
      %p271 = por %p269, %p270
      %p272 = scmp.ne.s32.totalorder %s264, %s267
      %p273 = scmp.eq.s32.totalorder %s25, 0
      %p274 = por %p272, %p273
      %p275 = scmp.ne.s32.totalorder %s264, %s267
      %p276 = scmp.eq.s32.totalorder %s30, 7
      %p277 = por %p275, %p276
      %p278 = scmp.ne.s32.totalorder %s267, %s268
      %p279 = scmp.eq.s32.totalorder %s30, 0
      %p280 = por %p278, %p279
      %p281 = scmp.ne.s32.totalorder %s267, %s268
      %p282 = scmp.eq.s32.totalorder %s31, 7
      %p283 = por %p281, %p282
      %p285 = scmp.ne.s32.totalorder %s268, %s284
      %p286 = scmp.eq.s32.totalorder %s31, 0
      %p287 = por %p285, %p286
      %s289 = sadd.s32 %s288, 1
      %p292 = scmp.eq.s32.totalorder %s25, 7
      %p293 = scmp.ne.s32.totalorder %s288, %s290
      %p294 = scmp.eq.s32.totalorder %s25, 0
      %p295 = por %p293, %p294
      %p296 = scmp.ne.s32.totalorder %s288, %s290
      %p297 = scmp.eq.s32.totalorder %s30, 7
      %p298 = por %p296, %p297
      %p299 = scmp.ne.s32.totalorder %s290, %s291
      %p300 = scmp.eq.s32.totalorder %s30, 0
      %p301 = por %p299, %p300
      %p302 = scmp.ne.s32.totalorder %s290, %s291
      %p303 = scmp.eq.s32.totalorder %s31, 7
      %p304 = por %p302, %p303
      %p306 = scmp.ne.s32.totalorder %s291, %s305
      %p307 = scmp.eq.s32.totalorder %s31, 0
      %p308 = por %p306, %p307
      %s309 = ssub.s32 %s32, %s51
      %s310 = ssub.s32 %s34, %s43
      %s311 = sor.u32 %s309, %s310
      %s312 = ssub.s32 %s33, %s47
      %s313 = sor.u32 %s311, %s312
      %p314 = scmp.eq.s32.totalorder %s313, 0
      %s316 = sadd.s32 %s315, 1
      %s317 = scalar_select %p314, %s315, %s316
      %p320 = pneg %p314
      %p321 = scmp.eq.s32.totalorder %s25, 7
      %p322 = por %p320, %p321
      %p323 = scmp.ne.s32.totalorder %s315, %s318
      %p324 = scmp.eq.s32.totalorder %s25, 0
      %p325 = por %p323, %p324
      %p326 = scmp.ne.s32.totalorder %s315, %s318
      %p327 = scmp.eq.s32.totalorder %s30, 7
      %p328 = por %p326, %p327
      %p329 = scmp.ne.s32.totalorder %s318, %s319
      %p330 = scmp.eq.s32.totalorder %s30, 0
      %p331 = por %p329, %p330
      %p332 = scmp.ne.s32.totalorder %s318, %s319
      %p333 = scmp.eq.s32.totalorder %s31, 7
      %p334 = por %p332, %p333
      %p336 = scmp.ne.s32.totalorder %s319, %s335
      %p337 = scmp.eq.s32.totalorder %s31, 0
      %p338 = por %p336, %p337
      %s339 = ssub.s32 %s32, %s51
      %s340 = ssub.s32 %s34, %s43
      %s341 = sor.u32 %s339, %s340
      %s342 = ssub.s32 %s33, %s47
      %s343 = sor.u32 %s341, %s342
      %p344 = scmp.eq.s32.totalorder %s343, 0
      %s346 = sadd.s32 %s345, 1
      %s347 = scalar_select %p344, %s345, %s346
      %p350 = pneg %p344
      %p351 = scmp.eq.s32.totalorder %s25, 7
      %p352 = por %p350, %p351
      %p353 = scmp.ne.s32.totalorder %s345, %s348
      %p354 = scmp.eq.s32.totalorder %s25, 0
      %p355 = por %p353, %p354
      %p356 = scmp.ne.s32.totalorder %s345, %s348
      %p357 = scmp.eq.s32.totalorder %s30, 7
      %p358 = por %p356, %p357
      %p359 = scmp.ne.s32.totalorder %s348, %s349
      %p360 = scmp.eq.s32.totalorder %s30, 0
      %p361 = por %p359, %p360
      %p362 = scmp.ne.s32.totalorder %s348, %s349
      %p363 = scmp.eq.s32.totalorder %s31, 7
      %p364 = por %p362, %p363
      %p366 = scmp.ne.s32.totalorder %s349, %s365
      %p367 = scmp.eq.s32.totalorder %s31, 0
      %p368 = por %p366, %p367
      %s369 = ssub.s32 %s32, %s51
      %s370 = ssub.s32 %s34, %s43
      %s371 = sor.u32 %s369, %s370
      %s372 = ssub.s32 %s33, %s47
      %s373 = sor.u32 %s371, %s372
      %p374 = scmp.eq.s32.totalorder %s373, 0
      %s376 = sadd.s32 %s375, 1
      %s377 = scalar_select %p374, %s375, %s376
      %p380 = pneg %p374
      %p381 = scmp.eq.s32.totalorder %s25, 7
      %p382 = por %p380, %p381
      %p383 = scmp.ne.s32.totalorder %s375, %s378
      %p384 = scmp.eq.s32.totalorder %s25, 0
      %p385 = por %p383, %p384
      %p386 = scmp.ne.s32.totalorder %s375, %s378
      %p387 = scmp.eq.s32.totalorder %s30, 7
      %p388 = por %p386, %p387
      %p389 = scmp.ne.s32.totalorder %s378, %s379
      %p390 = scmp.eq.s32.totalorder %s30, 0
      %p391 = por %p389, %p390
      %p392 = scmp.ne.s32.totalorder %s378, %s379
      %p393 = scmp.eq.s32.totalorder %s31, 7
      %p394 = por %p392, %p393
      %p396 = scmp.ne.s32.totalorder %s379, %s395
      %p397 = scmp.eq.s32.totalorder %s31, 0
      %p398 = por %p396, %p397
      %p399 = scmp.le.s32.totalorder 1, %s25
      %p400 = scmp.lt.s32.totalorder %s25, 9
      %p401 = pnand %p399, %p400
      %p402 = pneg %p401
      // Predicated region
      $region9: #{tpu_custom_call.1} parent=5 // pred_check
        _
      $region10: #{tpu_custom_call.1} parent=5 // pred_check_branch
        %404 = sbr.rel (%p401) target = $region12
      $region11: #{tpu_custom_call.1} parent=5 // pred_region
        %s405 = ssub.s32 %s25, 1
        // Predicated region
        $region13: #{tpu_custom_call.1} parent=11 // pred_check
          %p406 = pneg %p254
        $region14: #{tpu_custom_call.1} parent=11 // pred_check_branch
          %408 = sbr.rel (%p406) target = $region16
        $region15: #{tpu_custom_call.1} parent=11 // pred_region
          %p409 = scmp.lt.s32.totalorder %s36, 0
          %s410 = scalar_select %p409, %s36, 0
          %s411 = smul.addr %s410, 8
          %s412 = scalar_lea.vmem %s7, %s411
        $region16: #{tpu_custom_call.1} parent=11 // pred_fallthru
          _
        // Predicated region
        $region17: #{tpu_custom_call.1} parent=11 // pred_check
          %p413 = pneg %p280
        $region18: #{tpu_custom_call.1} parent=11 // pred_check_branch
          %415 = sbr.rel (%p413) target = $region20
        $region19: #{tpu_custom_call.1} parent=11 // pred_region
          %p416 = scmp.lt.s32.totalorder %s36, 0
          %s417 = scalar_select %p416, %s36, 0
          %s418 = smul.addr %s417, 8
          %s419 = scalar_lea.vmem %s8, %s418
        $region20: #{tpu_custom_call.1} parent=11 // pred_fallthru
          _
        // Predicated region
        $region21: #{tpu_custom_call.1} parent=11 // pred_check
          %p420 = pneg %p301
        $region22: #{tpu_custom_call.1} parent=11 // pred_check_branch
          %422 = sbr.rel (%p420) target = $region24
        $region23: #{tpu_custom_call.1} parent=11 // pred_region
          _
        $region24: #{tpu_custom_call.1} parent=11 // pred_fallthru
          _
      $region12: #{tpu_custom_call.1} parent=5 // pred_fallthru
        _
      %p423 = scmp.lt.s32.totalorder %s25, 8
      // Predicated region
      $region25: #{tpu_custom_call.1} parent=5 // pred_check
        %p424 = pneg %p423
      $region26: #{tpu_custom_call.1} parent=5 // pred_check_branch
        %426 = sbr.rel (%p424) target = $region28
      $region27: #{tpu_custom_call.1} parent=5 // pred_region
        // Predicated region
        $region29: #{tpu_custom_call.1} parent=27 // pred_check
          %p427 = pneg %p66
        $region30: #{tpu_custom_call.1} parent=27 // pred_check_branch
          %429 = sbr.rel (%p427) target = $region32
        $region31: #{tpu_custom_call.1} parent=27 // pred_region
          %p430 = scmp.lt.s32.totalorder %s32, 1
          %s431 = scalar_select %p430, %s32, 1
          %p432 = scmp.lt.s32.totalorder %s33, 0
          %s433 = scalar_select %p432, %s33, 0
          %s434 = sadd.s32 %s433, %s431
          %s435 = smul.addr %s434, 8
          %s436 = scalar_lea.vmem %s0, %s435
        $region32: #{tpu_custom_call.1} parent=27 // pred_fallthru
          _
        // Predicated region
        $region33: #{tpu_custom_call.1} parent=27 // pred_check
          %p437 = pneg %p92
        $region34: #{tpu_custom_call.1} parent=27 // pred_check_branch
          %439 = sbr.rel (%p437) target = $region36
        $region35: #{tpu_custom_call.1} parent=27 // pred_region
          %p440 = scmp.lt.s32.totalorder %s34, 3
          %s441 = scalar_select %p440, %s34, 3
          %s442 = smul.addr %s441, 4
          %s443 = smul.addr %s442, 4
          %s444 = scalar_lea.vmem %s1, %s443
        $region36: #{tpu_custom_call.1} parent=27 // pred_fallthru
          _
        // Predicated region
        $region37: #{tpu_custom_call.1} parent=27 // pred_check
          %p445 = pneg %p118
        $region38: #{tpu_custom_call.1} parent=27 // pred_check_branch
          %447 = sbr.rel (%p445) target = $region40
        $region39: #{tpu_custom_call.1} parent=27 // pred_region
          %p448 = scmp.lt.s32.totalorder %s34, 3
          %s449 = scalar_select %p448, %s34, 3
          %s450 = smul.addr %s449, 4
          %s451 = smul.addr %s450, 4
          %s452 = scalar_lea.vmem %s2, %s451
        $region40: #{tpu_custom_call.1} parent=27 // pred_fallthru
          _
        // Predicated region
        $region41: #{tpu_custom_call.1} parent=27 // pred_check
          %p453 = pneg %p144
        $region42: #{tpu_custom_call.1} parent=27 // pred_check_branch
          %455 = sbr.rel (%p453) target = $region44
        $region43: #{tpu_custom_call.1} parent=27 // pred_region
          %p456 = scmp.lt.s32.totalorder %s34, 3
          %s457 = scalar_select %p456, %s34, 3
          %s458 = smul.addr %s457, 4
          %s459 = smul.addr %s458, 4
          %s460 = scalar_lea.vmem %s3, %s459
        $region44: #{tpu_custom_call.1} parent=27 // pred_fallthru
          _
        // Predicated region
        $region45: #{tpu_custom_call.1} parent=27 // pred_check
          %p461 = pneg %p170
        $region46: #{tpu_custom_call.1} parent=27 // pred_check_branch
          %463 = sbr.rel (%p461) target = $region48
        $region47: #{tpu_custom_call.1} parent=27 // pred_region
          %p464 = scmp.lt.s32.totalorder %s34, 3
          %s465 = scalar_select %p464, %s34, 3
          %s466 = scalar_lea.vmem %s4, %s465
        $region48: #{tpu_custom_call.1} parent=27 // pred_fallthru
          _
        // Predicated region
        $region49: #{tpu_custom_call.1} parent=27 // pred_check
          %p467 = pneg %p196
        $region50: #{tpu_custom_call.1} parent=27 // pred_check_branch
          %469 = sbr.rel (%p467) target = $region52
        $region51: #{tpu_custom_call.1} parent=27 // pred_region
          %p470 = scmp.lt.s32.totalorder %s34, 3
          %s471 = scalar_select %p470, %s34, 3
          %s472 = scalar_lea.vmem %s5, %s471
        $region52: #{tpu_custom_call.1} parent=27 // pred_fallthru
          _
        // Predicated region
        $region53: #{tpu_custom_call.1} parent=27 // pred_check
          %p473 = pneg %p222
        $region54: #{tpu_custom_call.1} parent=27 // pred_check_branch
          %475 = sbr.rel (%p473) target = $region56
        $region55: #{tpu_custom_call.1} parent=27 // pred_region
          %p476 = scmp.lt.s32.totalorder %s34, 3
          %s477 = scalar_select %p476, %s34, 3
          %s478 = scalar_lea.vmem %s6, %s477
        $region56: #{tpu_custom_call.1} parent=27 // pred_fallthru
          _
      $region28: #{tpu_custom_call.1} parent=5 // pred_fallthru
        _
      %p479 = scmp.le.s32.totalorder 1, %s25
      %p480 = scmp.lt.s32.totalorder %s25, 9
      %p481 = pnand %p479, %p480
      %p482 = pneg %p481
      // Predicated region
      $region57: #{tpu_custom_call.1} parent=5 // pred_check
        _
      $region58: #{tpu_custom_call.1} parent=5 // pred_check_branch
        %484 = sbr.rel (%p481) target = $region60
      $region59: #{tpu_custom_call.1} parent=5 // pred_region
        %s485 = ssub.s32 %s25, 1
        %p486 = scmp.lt.s32.totalorder %s35, 1
        %s487 = scalar_select %p486, %s35, 1
        %p488 = scmp.lt.s32.totalorder %s36, 0
        %s489 = scalar_select %p488, %s36, 0
        %s490 = sadd.s32 %s489, %s487
        %s491 = smul.addr %s490, 8
        %s492 = scalar_lea.vmem %s0, %s491
        %p493 = pneg %p72
        %p494 = pneg %p69
        %p495 = scmp.lt.s32.totalorder %s37, 3
        %s496 = scalar_select %p495, %s37, 3
        %s497 = smul.addr %s496, 4
        %s498 = smul.addr %s497, 4
        %s499 = scalar_lea.vmem %s1, %s498
        %p500 = pneg %p98
        %p501 = pneg %p95
        %p502 = scmp.lt.s32.totalorder %s37, 3
        %s503 = scalar_select %p502, %s37, 3
        %s504 = smul.addr %s503, 4
        %s505 = smul.addr %s504, 4
        %s506 = scalar_lea.vmem %s2, %s505
        %p507 = pneg %p124
        %p508 = pneg %p121
        %p509 = scmp.lt.s32.totalorder %s37, 3
        %s510 = scalar_select %p509, %s37, 3
        %s511 = smul.addr %s510, 4
        %s512 = smul.addr %s511, 4
        %s513 = scalar_lea.vmem %s3, %s512
        %p514 = pneg %p150
        %p515 = pneg %p147
        %p516 = scmp.lt.s32.totalorder %s37, 3
        %s517 = scalar_select %p516, %s37, 3
        %s518 = scalar_lea.vmem %s4, %s517
        %p519 = pneg %p176
        %p520 = pneg %p173
        %p521 = scmp.lt.s32.totalorder %s37, 3
        %s522 = scalar_select %p521, %s37, 3
        %s523 = scalar_lea.vmem %s5, %s522
        %p524 = pneg %p202
        %p525 = pneg %p199
        %p526 = scmp.lt.s32.totalorder %s37, 3
        %s527 = scalar_select %p526, %s37, 3
        %s528 = scalar_lea.vmem %s6, %s527
        %p529 = pneg %p228
        %p530 = pneg %p225
        %p531 = scmp.lt.s32.totalorder %s36, 0
        %s532 = scalar_select %p531, %s36, 0
        %s533 = smul.addr %s532, 8
        %s534 = scalar_lea.vmem %s7, %s533
        %p535 = pneg %p254
        %p536 = pneg %p251
        %p537 = scmp.lt.s32.totalorder %s36, 0
        %s538 = scalar_select %p537, %s36, 0
        %s539 = smul.addr %s538, 8
        %s540 = scalar_lea.vmem %s8, %s539
        %p541 = pneg %p280
        %p542 = pneg %p277
        %p543 = pneg %p301
        %p544 = pneg %p298
        %p545 = pneg %p331
        %p546 = pneg %p328
        %s547 = sand.u32 %s318, 1
        %s548 = scalar_lea.sflag [#allocation3], %s547
        %s549 = sand.u32 %s318, 1
        %s550 = smul.addr %s549, 4
        %s551 = scalar_lea.vmem [#allocation2], %s550
        %p552 = pneg %p361
        %p553 = pneg %p358
        %s554 = sand.u32 %s30, 1
        %s555 = scalar_lea.sflag [#allocation5], %s554
        %s556 = sand.u32 %s348, 1
        %s557 = smul.addr %s556, 4
        %s558 = scalar_lea.vmem [#allocation4], %s557
        %p559 = pneg %p391
        %p560 = pneg %p388
        %s561 = sand.u32 %s30, 1
        %s562 = scalar_lea.sflag [#allocation5], %s561
        %s563 = sand.u32 %s378, 1
        %s564 = smul.addr %s563, 4
        %s565 = scalar_lea.vmem [#allocation6], %s564
        %p566 = scmp.lt.s32.totalorder %s35, 1
        %s567 = scalar_select %p566, %s35, 1
        %p568 = scmp.lt.s32.totalorder %s36, 0
        %s569 = scalar_select %p568, %s36, 0
        %s570 = sadd.s32 %s569, %s567
        %s571 = smul.addr %s570, 8
        %s572 = scalar_lea.vmem %s0, %s571
        %p573 = scmp.lt.s32.totalorder %s37, 3
        %s574 = scalar_select %p573, %s37, 3
        %s575 = smul.addr %s574, 4
        %s576 = smul.addr %s575, 4
        %s577 = scalar_lea.vmem %s1, %s576
        %p578 = scmp.lt.s32.totalorder %s37, 3
        %s579 = scalar_select %p578, %s37, 3
        %s580 = smul.addr %s579, 4
        %s581 = smul.addr %s580, 4
        %s582 = scalar_lea.vmem %s2, %s581
        %p583 = scmp.lt.s32.totalorder %s37, 3
        %s584 = scalar_select %p583, %s37, 3
        %s585 = smul.addr %s584, 4
        %s586 = smul.addr %s585, 4
        %s587 = scalar_lea.vmem %s3, %s586
        %p588 = scmp.lt.s32.totalorder %s37, 3
        %s589 = scalar_select %p588, %s37, 3
        %s590 = scalar_lea.vmem %s4, %s589
        %p591 = scmp.lt.s32.totalorder %s37, 3
        %s592 = scalar_select %p591, %s37, 3
        %s593 = scalar_lea.vmem %s5, %s592
        %p594 = scmp.lt.s32.totalorder %s37, 3
        %s595 = scalar_select %p594, %s37, 3
        %s596 = scalar_lea.vmem %s6, %s595
        %p597 = scmp.lt.s32.totalorder %s36, 0
        %s598 = scalar_select %p597, %s36, 0
        %s599 = smul.addr %s598, 8
        %s600 = scalar_lea.vmem %s7, %s599
        %p601 = scmp.lt.s32.totalorder %s36, 0
        %s602 = scalar_select %p601, %s36, 0
        %s603 = smul.addr %s602, 8
        %s604 = scalar_lea.vmem %s8, %s603
        %v606 = vld [vmem:[%s572] sm:$0xff]
        %v607 = vpack.c.bf16 %v606, %v606
        %v608 = vld [vmem:[%s577] sm:$0xf]
        %v609 = vld [vmem:[%s577 + $0x4] sm:$0xf]
        %v610 = vld [vmem:[%s577 + $0x8] sm:$0xf]
        %v611 = vld [vmem:[%s577 + $0xc] sm:$0xf]
        %v612 = vld [vmem:[%s590] sm:$0x1]
        %v614 = vlaneseq
        %v615 = vshrl.u32 %v614, 7
        %v616 = vsub.s32 0, %v615
        %v617 = vrot.slane %v612, %v616
        %v623 = vunpack.c.l.b16 %v608
        %v624 = vunpack.c.l.b16 %v609
        %v625 = vunpack.c.l.b16 %v610
        %v626 = vunpack.c.l.b16 %v611
        %v627 = vpack.c.b16 %v624, %v623
        %v628 = vpack.c.b16 %v626, %v625
        %vm631 = vcmask 261120
        %v633 = vsel %vm631, %v607, 0
        %635 = vmatprep.subr.bf16.mxu0 0
        %636 = vmatpush1.bf16.msra.mxu0 %v627
        %637 = vmatprep.subr.bf16.mxu0 0
        %638 = vmatpush1.bf16.msra.mxu0 %v628
        %639 = vmatprep.subr.bf16.mxu0 0
        %640 = vmatpush1.bf16.msra.mxu0 0
        %641 = vmatprep.subr.bf16.mxu0 0
        %642 = vmatpush1.bf16.msra.mxu0 0
        %643 = vmatprep.subr.bf16.mxu0 0
        %644 = vmatpush1.bf16.msra.mxu0 0
        %645 = vmatprep.subr.bf16.mxu0 0
        %646 = vmatpush1.bf16.msra.mxu0 0
        %647 = vmatprep.subr.bf16.mxu0 0
        %648 = vmatpush1.bf16.msra.mxu0 0
        %649 = vmatprep.subr.bf16.mxu0 0
        %650 = vmatpush1.bf16.msra.mxu0 0
        %651 = vmatprep.subr.bf16.mxu0 0
        %652 = vmatpush1.bf16.msra.mxu0 0
        %653 = vmatprep.subr.bf16.mxu0 0
        %654 = vmatpush1.bf16.msra.mxu0 0
        %655 = vmatprep.subr.bf16.mxu0 0
        %656 = vmatpush1.bf16.msra.mxu0 0
        %657 = vmatprep.subr.bf16.mxu0 0
        %658 = vmatpush1.bf16.msra.mxu0 0
        %659 = vmatprep.subr.bf16.mxu0 0
        %660 = vmatpush1.bf16.msra.mxu0 0
        %661 = vmatprep.subr.bf16.mxu0 0
        %662 = vmatpush1.bf16.msra.mxu0 0
        %663 = vmatprep.subr.bf16.mxu0 0
        %664 = vmatpush1.bf16.msra.mxu0 0
        %665 = vmatprep.subr.bf16.mxu0 0
        %666 = vmatpush1.bf16.msra.mxu0 0
        %667 = vmatprep.mubr.bf16.mxu0 0
        %668 = vmatmul.mubr.bf16.gmra.mrb[0].mxu0 %v633
        %v669 = vpop.f32.mrb[0].mxu0
        %v670 = vadd.f32 %v617, %v669
        %v671 = vpop.f32.mrb[0].mxu0
        %v672 = vpop.f32.mrb[0].mxu0
        %v673 = vpop.f32.mrb[0].mxu0
        %674 = vdwg.mxu0
        %v675 = vld [vmem:[%s582] sm:$0xf]
        %v676 = vld [vmem:[%s582 + $0x4] sm:$0xf]
        %v677 = vld [vmem:[%s582 + $0x8] sm:$0xf]
        %v678 = vld [vmem:[%s582 + $0xc] sm:$0xf]
        %v679 = vld [vmem:[%s593] sm:$0x1]
        %v681 = vlaneseq
        %v682 = vshrl.u32 %v681, 7
        %v683 = vsub.s32 0, %v682
        %v684 = vrot.slane %v679, %v683
        %v690 = vunpack.c.l.b16 %v675
        %v691 = vunpack.c.l.b16 %v676
        %v692 = vunpack.c.l.b16 %v677
        %v693 = vunpack.c.l.b16 %v678
        %v694 = vpack.c.b16 %v691, %v690
        %v695 = vpack.c.b16 %v693, %v692
        %698 = vmatprep.subr.bf16.mxu0 0
        %699 = vmatpush1.bf16.msra.mxu0 %v694
        %700 = vmatprep.subr.bf16.mxu0 0
        %701 = vmatpush1.bf16.msra.mxu0 %v695
        %702 = vmatprep.subr.bf16.mxu0 0
        %703 = vmatpush1.bf16.msra.mxu0 0
        %704 = vmatprep.subr.bf16.mxu0 0
        %705 = vmatpush1.bf16.msra.mxu0 0
        %706 = vmatprep.subr.bf16.mxu0 0
        %707 = vmatpush1.bf16.msra.mxu0 0
        %708 = vmatprep.subr.bf16.mxu0 0
        %709 = vmatpush1.bf16.msra.mxu0 0
        %710 = vmatprep.subr.bf16.mxu0 0
        %711 = vmatpush1.bf16.msra.mxu0 0
        %712 = vmatprep.subr.bf16.mxu0 0
        %713 = vmatpush1.bf16.msra.mxu0 0
        %714 = vmatprep.subr.bf16.mxu0 0
        %715 = vmatpush1.bf16.msra.mxu0 0
        %716 = vmatprep.subr.bf16.mxu0 0
        %717 = vmatpush1.bf16.msra.mxu0 0
        %718 = vmatprep.subr.bf16.mxu0 0
        %719 = vmatpush1.bf16.msra.mxu0 0
        %720 = vmatprep.subr.bf16.mxu0 0
        %721 = vmatpush1.bf16.msra.mxu0 0
        %722 = vmatprep.subr.bf16.mxu0 0
        %723 = vmatpush1.bf16.msra.mxu0 0
        %724 = vmatprep.subr.bf16.mxu0 0
        %725 = vmatpush1.bf16.msra.mxu0 0
        %726 = vmatprep.subr.bf16.mxu0 0
        %727 = vmatpush1.bf16.msra.mxu0 0
        %728 = vmatprep.subr.bf16.mxu0 0
        %729 = vmatpush1.bf16.msra.mxu0 0
        %730 = vmatprep.mubr.bf16.mxu0 0
        %731 = vmatmul.mubr.bf16.gmra.mrb[0].mxu0 %v633
        %v732 = vpop.f32.mrb[0].mxu0
        %v733 = vadd.f32 %v684, %v732
        %v734 = vpop.f32.mrb[0].mxu0
        %v735 = vpop.f32.mrb[0].mxu0
        %v736 = vpop.f32.mrb[0].mxu0
        %737 = vdwg.mxu0
        %v738 = vld [vmem:[%s587] sm:$0xf]
        %v739 = vld [vmem:[%s587 + $0x4] sm:$0xf]
        %v740 = vld [vmem:[%s587 + $0x8] sm:$0xf]
        %v741 = vld [vmem:[%s587 + $0xc] sm:$0xf]
        %v742 = vld [vmem:[%s596] sm:$0x1]
        %v744 = vlaneseq
        %v745 = vshrl.u32 %v744, 7
        %v746 = vsub.s32 0, %v745
        %v747 = vrot.slane %v742, %v746
        %v753 = vunpack.c.l.b16 %v738
        %v754 = vunpack.c.l.b16 %v739
        %v755 = vunpack.c.l.b16 %v740
        %v756 = vunpack.c.l.b16 %v741
        %v757 = vpack.c.b16 %v754, %v753
        %v758 = vpack.c.b16 %v756, %v755
        %761 = vmatprep.subr.bf16.mxu0 0
        %762 = vmatpush1.bf16.msra.mxu0 %v757
        %763 = vmatprep.subr.bf16.mxu0 0
        %764 = vmatpush1.bf16.msra.mxu0 %v758
        %765 = vmatprep.subr.bf16.mxu0 0
        %766 = vmatpush1.bf16.msra.mxu0 0
        %767 = vmatprep.subr.bf16.mxu0 0
        %768 = vmatpush1.bf16.msra.mxu0 0
        %769 = vmatprep.subr.bf16.mxu0 0
        %770 = vmatpush1.bf16.msra.mxu0 0
        %771 = vmatprep.subr.bf16.mxu0 0
        %772 = vmatpush1.bf16.msra.mxu0 0
        %773 = vmatprep.subr.bf16.mxu0 0
        %774 = vmatpush1.bf16.msra.mxu0 0
        %775 = vmatprep.subr.bf16.mxu0 0
        %776 = vmatpush1.bf16.msra.mxu0 0
        %777 = vmatprep.subr.bf16.mxu0 0
        %778 = vmatpush1.bf16.msra.mxu0 0
        %779 = vmatprep.subr.bf16.mxu0 0
        %780 = vmatpush1.bf16.msra.mxu0 0
        %781 = vmatprep.subr.bf16.mxu0 0
        %782 = vmatpush1.bf16.msra.mxu0 0
        %783 = vmatprep.subr.bf16.mxu0 0
        %784 = vmatpush1.bf16.msra.mxu0 0
        %785 = vmatprep.subr.bf16.mxu0 0
        %786 = vmatpush1.bf16.msra.mxu0 0
        %787 = vmatprep.subr.bf16.mxu0 0
        %788 = vmatpush1.bf16.msra.mxu0 0
        %789 = vmatprep.subr.bf16.mxu0 0
        %790 = vmatpush1.bf16.msra.mxu0 0
        %791 = vmatprep.subr.bf16.mxu0 0
        %792 = vmatpush1.bf16.msra.mxu0 0
        %793 = vmatprep.mubr.bf16.mxu0 0
        %794 = vmatmul.mubr.bf16.gmra.mrb[0].mxu0 %v633
        %v795 = vpop.f32.mrb[0].mxu0
        %v796 = vadd.f32 %v747, %v795
        %v797 = vpop.f32.mrb[0].mxu0
        %v798 = vpop.f32.mrb[0].mxu0
        %v799 = vpop.f32.mrb[0].mxu0
        %800 = vdwg.mxu0
        %v801 = vld [vmem:[%s600] sm:$0xff]
        %v802 = vld [vmem:[%s604] sm:$0xff]
        %v803 = vld [vmem:[%s9] sm:$0xff]
        %vm804 = vcmask 64512
        %v806 = vsel %vm804, %v670, 0
        %808 = vmatprep.subr.mxu0 0.0
        %809 = vmatpush1.msra.mxu0 %v803
        %810 = vmatprep.subr.mxu0 0.0
        %811 = vmatpush1.msra.mxu0 0.0
        %812 = vmatprep.subr.mxu0 0.0
        %813 = vmatpush1.msra.mxu0 0.0
        %814 = vmatprep.subr.mxu0 0.0
        %815 = vmatpush1.msra.mxu0 0.0
        %816 = vmatprep.subr.mxu0 0.0
        %817 = vmatpush1.msra.mxu0 0.0
        %818 = vmatprep.subr.mxu0 0.0
        %819 = vmatpush1.msra.mxu0 0.0
        %820 = vmatprep.subr.mxu0 0.0
        %821 = vmatpush1.msra.mxu0 0.0
        %822 = vmatprep.subr.mxu0 0.0
        %823 = vmatpush1.msra.mxu0 0.0
        %824 = vmatprep.subr.mxu0 0.0
        %825 = vmatpush1.msra.mxu0 0.0
        %826 = vmatprep.subr.mxu0 0.0
        %827 = vmatpush1.msra.mxu0 0.0
        %828 = vmatprep.subr.mxu0 0.0
        %829 = vmatpush1.msra.mxu0 0.0
        %830 = vmatprep.subr.mxu0 0.0
        %831 = vmatpush1.msra.mxu0 0.0
        %832 = vmatprep.subr.mxu0 0.0
        %833 = vmatpush1.msra.mxu0 0.0
        %834 = vmatprep.subr.mxu0 0.0
        %835 = vmatpush1.msra.mxu0 0.0
        %836 = vmatprep.subr.mxu0 0.0
        %837 = vmatpush1.msra.mxu0 0.0
        %838 = vmatprep.subr.mxu0 0.0
        %839 = vmatpush1.msra.mxu0 0.0
        %840 = vmatprep.subr.mxu0 0.0
        %841 = vmatpush1.msra.mxu0 0.0
        %842 = vmatprep.subr.mxu0 0.0
        %843 = vmatpush1.msra.mxu0 0.0
        %844 = vmatprep.subr.mxu0 0.0
        %845 = vmatpush1.msra.mxu0 0.0
        %846 = vmatprep.subr.mxu0 0.0
        %847 = vmatpush1.msra.mxu0 0.0
        %848 = vmatprep.subr.mxu0 0.0
        %849 = vmatpush1.msra.mxu0 0.0
        %850 = vmatprep.subr.mxu0 0.0
        %851 = vmatpush1.msra.mxu0 0.0
        %852 = vmatprep.subr.mxu0 0.0
        %853 = vmatpush1.msra.mxu0 0.0
        %854 = vmatprep.subr.mxu0 0.0
        %855 = vmatpush1.msra.mxu0 0.0
        %856 = vmatprep.subr.mxu0 0.0
        %857 = vmatpush1.msra.mxu0 0.0
        %858 = vmatprep.subr.mxu0 0.0
        %859 = vmatpush1.msra.mxu0 0.0
        %860 = vmatprep.subr.mxu0 0.0
        %861 = vmatpush1.msra.mxu0 0.0
        %862 = vmatprep.subr.mxu0 0.0
        %863 = vmatpush1.msra.mxu0 0.0
        %864 = vmatprep.subr.mxu0 0.0
        %865 = vmatpush1.msra.mxu0 0.0
        %866 = vmatprep.subr.mxu0 0.0
        %867 = vmatpush1.msra.mxu0 0.0
        %868 = vmatprep.subr.mxu0 0.0
        %869 = vmatpush1.msra.mxu0 0.0
        %870 = vmatprep.subr.mxu0 0.0
        %871 = vmatpush1.msra.mxu0 0.0
        %872 = vmatprep.mubr.f32.mxu0 0.0
        %873 = vmatmul.mubr.f32.gmra.mrb[0].mxu0 %v806
        %v874 = vpop.f32.mrb[0].mxu0
        %v875 = vadd.f32 0.0, %v874
        %v876 = vpop.f32.mrb[0].mxu0
        %877 = vdwg.mxu0
        %v879 = vsel %vm804, %v733, 0
        %881 = vmatprep.subr.mxu0 0.0
        %882 = vmatpush1.msra.mxu0 %v803
        %883 = vmatprep.subr.mxu0 0.0
        %884 = vmatpush1.msra.mxu0 0.0
        %885 = vmatprep.subr.mxu0 0.0
        %886 = vmatpush1.msra.mxu0 0.0
        %887 = vmatprep.subr.mxu0 0.0
        %888 = vmatpush1.msra.mxu0 0.0
        %889 = vmatprep.subr.mxu0 0.0
        %890 = vmatpush1.msra.mxu0 0.0
        %891 = vmatprep.subr.mxu0 0.0
        %892 = vmatpush1.msra.mxu0 0.0
        %893 = vmatprep.subr.mxu0 0.0
        %894 = vmatpush1.msra.mxu0 0.0
        %895 = vmatprep.subr.mxu0 0.0
        %896 = vmatpush1.msra.mxu0 0.0
        %897 = vmatprep.subr.mxu0 0.0
        %898 = vmatpush1.msra.mxu0 0.0
        %899 = vmatprep.subr.mxu0 0.0
        %900 = vmatpush1.msra.mxu0 0.0
        %901 = vmatprep.subr.mxu0 0.0
        %902 = vmatpush1.msra.mxu0 0.0
        %903 = vmatprep.subr.mxu0 0.0
        %904 = vmatpush1.msra.mxu0 0.0
        %905 = vmatprep.subr.mxu0 0.0
        %906 = vmatpush1.msra.mxu0 0.0
        %907 = vmatprep.subr.mxu0 0.0
        %908 = vmatpush1.msra.mxu0 0.0
        %909 = vmatprep.subr.mxu0 0.0
        %910 = vmatpush1.msra.mxu0 0.0
        %911 = vmatprep.subr.mxu0 0.0
        %912 = vmatpush1.msra.mxu0 0.0
        %913 = vmatprep.subr.mxu0 0.0
        %914 = vmatpush1.msra.mxu0 0.0
        %915 = vmatprep.subr.mxu0 0.0
        %916 = vmatpush1.msra.mxu0 0.0
        %917 = vmatprep.subr.mxu0 0.0
        %918 = vmatpush1.msra.mxu0 0.0
        %919 = vmatprep.subr.mxu0 0.0
        %920 = vmatpush1.msra.mxu0 0.0
        %921 = vmatprep.subr.mxu0 0.0
        %922 = vmatpush1.msra.mxu0 0.0
        %923 = vmatprep.subr.mxu0 0.0
        %924 = vmatpush1.msra.mxu0 0.0
        %925 = vmatprep.subr.mxu0 0.0
        %926 = vmatpush1.msra.mxu0 0.0
        %927 = vmatprep.subr.mxu0 0.0
        %928 = vmatpush1.msra.mxu0 0.0
        %929 = vmatprep.subr.mxu0 0.0
        %930 = vmatpush1.msra.mxu0 0.0
        %931 = vmatprep.subr.mxu0 0.0
        %932 = vmatpush1.msra.mxu0 0.0
        %933 = vmatprep.subr.mxu0 0.0
        %934 = vmatpush1.msra.mxu0 0.0
        %935 = vmatprep.subr.mxu0 0.0
        %936 = vmatpush1.msra.mxu0 0.0
        %937 = vmatprep.subr.mxu0 0.0
        %938 = vmatpush1.msra.mxu0 0.0
        %939 = vmatprep.subr.mxu0 0.0
        %940 = vmatpush1.msra.mxu0 0.0
        %941 = vmatprep.subr.mxu0 0.0
        %942 = vmatpush1.msra.mxu0 0.0
        %943 = vmatprep.subr.mxu0 0.0
        %944 = vmatpush1.msra.mxu0 0.0
        %945 = vmatprep.mubr.f32.mxu0 0.0
        %946 = vmatmul.mubr.f32.gmra.mrb[0].mxu0 %v879
        %v947 = vpop.f32.mrb[0].mxu0
        %v948 = vadd.f32 0.0, %v947
        %v949 = vpop.f32.mrb[0].mxu0
        %950 = vdwg.mxu0
        %v951 = vmul.f32 %v670, %v801
        %v952 = vmul.f32 %v875, %v802
        %v953 = vadd.f32 %v951, %v952
        %v954 = vpack.c.bf16 %v953, %v953
        %vm955 = vcmask 60416
        %956 = vst.msk [vmem:[%s551] sm:$0xf] %vm955, %v954
        %v957 = vmul.f32 %v733, %v801
        %v958 = vmul.f32 %v948, %v802
        %v959 = vadd.f32 %v957, %v958
        %v960 = vpack.c.bf16 %v959, %v959
        %961 = vst.msk [vmem:[%s558] sm:$0xf] %vm955, %v960
        %v962 = vpack.c.bf16 %v796, %v796
        %963 = vst.msk [vmem:[%s565] sm:$0xf] %vm955, %v962
        %s964 = sand.u32 %s318, 1
        %s965 = scalar_lea.sflag [#allocation3], %s964
        %s966 = sand.u32 %s318, 1
        %s967 = smul.addr %s966, 4
        %s968 = scalar_lea.vmem [#allocation2], %s967
        %s969 = sand.u32 %s30, 1
        %s970 = scalar_lea.sflag [#allocation5], %s969
        %s971 = sand.u32 %s348, 1
        %s972 = smul.addr %s971, 4
        %s973 = scalar_lea.vmem [#allocation4], %s972
        %s974 = sand.u32 %s30, 1
        %s975 = scalar_lea.sflag [#allocation5], %s974
        %s976 = sand.u32 %s378, 1
        %s977 = smul.addr %s976, 4
        %s978 = scalar_lea.vmem [#allocation6], %s977
        // Predicated region
        $region61: #{tpu_custom_call.1} parent=59 // pred_check
          %p979 = pneg %p328
        $region62: #{tpu_custom_call.1} parent=59 // pred_check_branch
          %981 = sbr.rel (%p979) target = $region64
        $region63: #{tpu_custom_call.1} parent=59 // pred_region
          %s983 = ssub.s32 64, 64
          %984 = vsyncadd %s965, %s983
          %s985 = sadd.s32 %s36, %s37
          %s986 = smul.addr %s35, 4
          %s987 = sadd.s32 %s985, %s986
          %s988 = smul.addr %s987, 64
          %s989 = scalar_lea.hbm %s10, %s988
          %s991 = sshll.u32 %s968, 4
          %s992 = int_to_ptr.vmem [resolvable:$true] %s991
          %994 = dma.vmem_to_hbm [thread:$0]  %s992, 64, %s989, %s965
        $region64: #{tpu_custom_call.1} parent=59 // pred_fallthru
          _
        // Predicated region
        $region65: #{tpu_custom_call.1} parent=59 // pred_check
          %p995 = pneg %p358
        $region66: #{tpu_custom_call.1} parent=59 // pred_check_branch
          %997 = sbr.rel (%p995) target = $region68
        $region67: #{tpu_custom_call.1} parent=59 // pred_region
          %s999 = ssub.s32 64, 64
          %1000 = vsyncadd %s970, %s999
          %s1001 = sadd.s32 %s36, %s37
          %s1002 = smul.addr %s35, 4
          %s1003 = sadd.s32 %s1001, %s1002
          %s1004 = smul.addr %s1003, 64
          %s1005 = scalar_lea.hbm %s11, %s1004
          %s1007 = sshll.u32 %s973, 4
          %s1008 = int_to_ptr.vmem [resolvable:$true] %s1007
          %1010 = dma.vmem_to_hbm [thread:$0]  %s1008, 64, %s1005, %s970
        $region68: #{tpu_custom_call.1} parent=59 // pred_fallthru
          _
        // Predicated region
        $region69: #{tpu_custom_call.1} parent=59 // pred_check
          %p1011 = pneg %p388
        $region70: #{tpu_custom_call.1} parent=59 // pred_check_branch
          %1013 = sbr.rel (%p1011) target = $region72
        $region71: #{tpu_custom_call.1} parent=59 // pred_region
          %s1015 = ssub.s32 64, 64
          %1016 = vsyncadd %s975, %s1015
          %s1017 = sadd.s32 %s36, %s37
          %s1018 = smul.addr %s35, 4
          %s1019 = sadd.s32 %s1017, %s1018
          %s1020 = smul.addr %s1019, 64
          %s1021 = scalar_lea.hbm %s12, %s1020
          %s1023 = sshll.u32 %s978, 4
          %s1024 = int_to_ptr.vmem [resolvable:$true] %s1023
          %1026 = dma.vmem_to_hbm [thread:$0]  %s1024, 64, %s1021, %s975
        $region72: #{tpu_custom_call.1} parent=59 // pred_fallthru
          _
      $region60: #{tpu_custom_call.1} parent=5 // pred_fallthru
        _
      %p1027 = scmp.le.s32.totalorder 2, %s25
      // Predicated region
      $region73: #{tpu_custom_call.1} parent=5 // pred_check
        %p1028 = pneg %p1027
      $region74: #{tpu_custom_call.1} parent=5 // pred_check_branch
        %1030 = sbr.rel (%p1028) target = $region76
      $region75: #{tpu_custom_call.1} parent=5 // pred_region
        %s1031 = ssub.s32 %s25, 2
        // Predicated region
        $region77: #{tpu_custom_call.1} parent=75 // pred_check
          %p1032 = pneg %p334
        $region78: #{tpu_custom_call.1} parent=75 // pred_check_branch
          %1034 = sbr.rel (%p1032) target = $region80
        $region79: #{tpu_custom_call.1} parent=75 // pred_region
          %s1035 = sand.u32 %s319, 1
          %s1036 = scalar_lea.sflag [#allocation3], %s1035
          %s1037 = sand.u32 %s319, 1
          %s1038 = smul.addr %s1037, 4
          %s1039 = scalar_lea.vmem [#allocation2], %s1038
          %1040 = dma.done %s1036, 64
        $region80: #{tpu_custom_call.1} parent=75 // pred_fallthru
          _
        // Predicated region
        $region81: #{tpu_custom_call.1} parent=75 // pred_check
          %p1041 = pneg %p364
        $region82: #{tpu_custom_call.1} parent=75 // pred_check_branch
          %1043 = sbr.rel (%p1041) target = $region84
        $region83: #{tpu_custom_call.1} parent=75 // pred_region
          %s1044 = sand.u32 %s31, 1
          %s1045 = scalar_lea.sflag [#allocation5], %s1044
          %s1046 = sand.u32 %s349, 1
          %s1047 = smul.addr %s1046, 4
          %s1048 = scalar_lea.vmem [#allocation4], %s1047
          %1049 = dma.done %s1045, 64
        $region84: #{tpu_custom_call.1} parent=75 // pred_fallthru
          _
        // Predicated region
        $region85: #{tpu_custom_call.1} parent=75 // pred_check
          %p1050 = pneg %p394
        $region86: #{tpu_custom_call.1} parent=75 // pred_check_branch
          %1052 = sbr.rel (%p1050) target = $region88
        $region87: #{tpu_custom_call.1} parent=75 // pred_region
          %s1053 = sand.u32 %s31, 1
          %s1054 = scalar_lea.sflag [#allocation5], %s1053
          %s1055 = sand.u32 %s379, 1
          %s1056 = smul.addr %s1055, 4
          %s1057 = scalar_lea.vmem [#allocation6], %s1056
          %1058 = dma.done %s1054, 64
        $region88: #{tpu_custom_call.1} parent=75 // pred_fallthru
          _
      $region76: #{tpu_custom_call.1} parent=5 // pred_fallthru
        _
    $region6: #{tpu_custom_call.1} parent=1 // loop_footer
      %s29 = sadd.s32 1, %s25
    $region7: #{tpu_custom_call.1} parent=1 // loop_footer_branch
      %24 = sbr.rel target = $region3
    $region8: #{tpu_custom_call.1} parent=1 // loop_exit
      _
    %1059 = vsyncpa [#allocation3], 1
    %s1060 = scalar_lea.sflag [#allocation3], 1
    %1061 = vsyncpa %s1060, 1
    %1062 = vsyncpa [#allocation5], 1
    %s1063 = scalar_lea.sflag [#allocation5], 1
    %1064 = vsyncpa %s1063, 1

</llo_original>
